<compile_context>
chip_gen: v5e
topology: v5e:2x2
jax: 0.10.0
libtpu: 0.0.40
codegen_flags: <defaults>
</compile_context>

<pallas_src>
import functools

import jax
import jax.numpy as jnp
from jax.experimental import pallas as pl
from jax.experimental.pallas import tpu as pltpu


def _round_up(n, m):
    return ((n + m - 1) // m) * m


# ----------------------------------------------------------------------------
# Fused attention-gate kernel: one (B, spatial-tile) grid step.
#   g_ref : (Cg, T) f32       x_ref : (Cl, T) f32
#   wg_ref: (Fint, Cg) bf16   wx_ref: (Fint, Cl) bf16
#   b_ref : (Fint, 1) f32     wp_ref: (Fint, 1) f32    bp_ref: (1, 1) f32
#   o_ref : (Cl, T) f32
# ----------------------------------------------------------------------------
def _attention_gate_kernel(g_ref, x_ref, wg_ref, wx_ref, b_ref, wp_ref, bp_ref,
                           o_ref):
    x = x_ref[...]                                      # f32, reused for gating
    # h = relu(Wg^T g + Wx^T x + (bg+bx))  -- two bf16 MXU pushes, f32 accum.
    h = jnp.dot(wg_ref[...], g_ref[...].astype(jnp.bfloat16),
                preferred_element_type=jnp.float32)
    h = h + jnp.dot(wx_ref[...], x.astype(jnp.bfloat16),
                    preferred_element_type=jnp.float32)
    h = jnp.maximum(h + b_ref[...], 0.0)                # (Fint, T) f32
    # psi 1x1 conv (N=1): VPU broadcast-multiply + XLU sublane reduce, f32.
    a = jnp.sum(h * wp_ref[...], axis=0, keepdims=True) + bp_ref[...]  # (1, T)
    a = jax.nn.sigmoid(a)
    # gate: out = x * psi   (x kept in f32, psi broadcast over channels)
    o_ref[...] = (x * a).astype(o_ref.dtype)


def _choose_spatial_tile(HW, Cg, Cl, thw, vmem_budget=24 * 1024 * 1024):
    """Pick a lane-dense spatial tile (multiple of 128, or the full extent)."""
    # Per-column HBM bytes per step (f32 g + f32 x read, f32 out write),
    # double-buffered by the pipeline.
    bytes_per_col = 2 * (4 * Cg + 4 * Cl + 4 * Cl)
    t_cap = max(128, (vmem_budget // bytes_per_col) // 128 * 128)
    T = max(128, (min(thw, t_cap) // 128) * 128)
    if HW <= T:
        return HW, HW                       # single full-width tile per image
    HWp = _round_up(HW, T)
    return T, HWp


# ----------------------------------------------------------------------------
# Attention_block forward (NCHW in / NCHW out) -- no transposes, no concat.
# ----------------------------------------------------------------------------
def attention_block_forward(g_nchw, x_nchw, folded, *, thw=8192,
                            out_dtype=jnp.float32):
    B, Cg, H, W = g_nchw.shape
    Cl = x_nchw.shape[1]
    Fint = folded["wgT"].shape[0]
    HW = H * W

    g = g_nchw.reshape(B, Cg, HW)           # contiguous merge: free reshape
    x = x_nchw.reshape(B, Cl, HW)

    T, HWp = _choose_spatial_tile(HW, Cg, Cl, thw)
    if HWp != HW:                           # only for odd spatial extents
        g = jnp.pad(g, ((0, 0), (0, 0), (0, HWp - HW)))
        x = jnp.pad(x, ((0, 0), (0, 0), (0, HWp - HW)))
    grid = (B, HWp // T)

    out = pl.pallas_call(
        _attention_gate_kernel,
        out_shape=jax.ShapeDtypeStruct((B, Cl, HWp), out_dtype),
        grid=grid,
        in_specs=[
            pl.BlockSpec((None, Cg, T), lambda b, t: (b, 0, t)),    # g slab
            pl.BlockSpec((None, Cl, T), lambda b, t: (b, 0, t)),    # x slab
            pl.BlockSpec((Fint, Cg), lambda b, t: (0, 0)),          # Wg^T (bf16)
            pl.BlockSpec((Fint, Cl), lambda b, t: (0, 0)),          # Wx^T (bf16)
            pl.BlockSpec((Fint, 1), lambda b, t: (0, 0)),           # bg + bx
            pl.BlockSpec((Fint, 1), lambda b, t: (0, 0)),           # psi weight
            pl.BlockSpec((1, 1), lambda b, t: (0, 0)),              # psi bias
        ],
        out_specs=pl.BlockSpec((None, Cl, T), lambda b, t: (b, 0, t)),
        compiler_params=pltpu.CompilerParams(
            dimension_semantics=("parallel", "parallel"),
            vmem_limit_bytes=32 * 1024 * 1024,
        ),
    )(g, x, folded["wgT"], folded["wxT"], folded["b_col"], folded["wp_col"],
      folded["bp"])

    if HWp != HW:
        out = out[:, :, :HW]
    return out.reshape(B, Cl, H, W)


# ----------------------------------------------------------------------------
# Parameters (raw PyTorch-style) and exact inference BatchNorm folding
# ----------------------------------------------------------------------------
def make_raw_params(F_g, F_l, F_int, key):
    ks = iter(jax.random.split(key, 32))
    nk = lambda: next(ks)

    def conv_w(cin, cout):
        return jax.random.normal(nk(), (cin, cout), jnp.float32) / jnp.sqrt(cin)

    def bias(cout):
        return 0.1 * jax.random.normal(nk(), (cout,), jnp.float32)

    def bn(c):
        return dict(
            gamma=1.0 + 0.1 * jax.random.normal(nk(), (c,), jnp.float32),
            beta=0.1 * jax.random.normal(nk(), (c,), jnp.float32),
            mean=0.1 * jax.random.normal(nk(), (c,), jnp.float32),
            var=1.0 + 0.1 * jax.random.uniform(nk(), (c,), jnp.float32),
        )

    return dict(
        wg=conv_w(F_g, F_int), bg=bias(F_int), bn_g=bn(F_int),
        wx=conv_w(F_l, F_int), bx=bias(F_int), bn_x=bn(F_int),
        wp=conv_w(F_int, 1), bp=bias(1), bn_p=bn(1),
        eps=1e-5,
    )


def fold_attention_params(raw):
    """Exact inference-time BN fold (uses actual running_mean / running_var)."""
    eps = raw["eps"]

    def fold(w, b, p):
        s = p["gamma"] / jnp.sqrt(p["var"] + eps)
        return w * s[None, :], (b - p["mean"]) * s + p["beta"]

    wg, bg = fold(raw["wg"], raw["bg"], raw["bn_g"])      # (Cg, Fint), (Fint,)
    wx, bx = fold(raw["wx"], raw["bx"], raw["bn_x"])      # (Cl, Fint), (Fint,)
    wp, bp = fold(raw["wp"], raw["bp"], raw["bn_p"])      # (Fint, 1), (1,)
    return dict(
        wgT=wg.T.astype(jnp.bfloat16),                    # (Fint, Cg)
        wxT=wx.T.astype(jnp.bfloat16),                    # (Fint, Cl)
        b_col=(bg + bx).reshape(-1, 1).astype(jnp.float32),   # (Fint, 1)
        wp_col=wp.reshape(-1, 1).astype(jnp.float32),          # (Fint, 1)
        bp=bp.reshape(1, 1).astype(jnp.float32),                # (1, 1)
    )


# ----------------------------------------------------------------------------
# Pure-JAX f32 reference (unfolded convs + explicit BN) for validation
# ----------------------------------------------------------------------------
def attention_block_reference(g_nchw, x_nchw, raw):
    eps = raw["eps"]

    def bn(v, p):
        return (v - p["mean"]) / jnp.sqrt(p["var"] + eps) * p["gamma"] + p["beta"]

    B, Cg, H, W = g_nchw.shape
    Cl = x_nchw.shape[1]
    g = jnp.transpose(g_nchw, (0, 2, 3, 1)).reshape(-1, Cg)
    x = jnp.transpose(x_nchw, (0, 2, 3, 1)).reshape(-1, Cl)
    g1 = bn(g @ raw["wg"] + raw["bg"], raw["bn_g"])
    x1 = bn(x @ raw["wx"] + raw["bx"], raw["bn_x"])
    h = jnp.maximum(g1 + x1, 0.0)
    psi = jax.nn.sigmoid(bn(h @ raw["wp"] + raw["bp"], raw["bn_p"]))
    y = x * psi
    return jnp.transpose(y.reshape(B, H, W, Cl), (0, 3, 1, 2))


if __name__ == "__main__":
    B, F_g, F_l, F_int = 2, 32, 32, 16
    H = W = 16

    key = jax.random.PRNGKey(0)
    kg, kx, kp = jax.random.split(key, 3)
    g = jax.random.normal(kg, (B, F_g, H, W), jnp.float32)
    x = jax.random.normal(kx, (B, F_l, H, W), jnp.float32)

    raw = make_raw_params(F_g, F_l, F_int, kp)
    folded = fold_attention_params(raw)

    # thw=128 at this small size -> grid=(2, 2): exercises multi-block
    # pipelining and the 2-way parallel batch axis.  Production default is
    # thw=8192 (multi-MB tiles).
    fwd = jax.jit(functools.partial(attention_block_forward, thw=128))
    out = fwd(g, x, folded)
    jax.block_until_ready(out)

    ref = attention_block_reference(g, x, raw)
    assert out.shape == (B, F_l, H, W)
    assert bool(jnp.all(jnp.isfinite(out)))
    max_err = float(jnp.max(jnp.abs(out - ref)))
    # bf16 MXU operands with f32 accumulation -> small, bounded error vs f32 ref
    assert max_err < 5e-2, f"max abs err {max_err}"
    print("KERNEL_OK")
</pallas_src>

<mosaic_0001>
module attributes {stable_mosaic.version = 11 : i64} {
  func.func @_attention_gate_kernel(%arg0: i32, %arg1: i32, %arg2: memref<1x32x128xf32, #tpu.memory_space<vmem>>, %arg3: memref<1x32x128xf32, #tpu.memory_space<vmem>>, %arg4: memref<16x32xbf16, #tpu.memory_space<vmem>>, %arg5: memref<16x32xbf16, #tpu.memory_space<vmem>>, %arg6: memref<16x1xf32, #tpu.memory_space<vmem>>, %arg7: memref<16x1xf32, #tpu.memory_space<vmem>>, %arg8: memref<1x1xf32, #tpu.memory_space<vmem>>, %arg9: memref<1x32x128xf32, #tpu.memory_space<vmem>>) attributes {dimension_semantics = [#tpu.dimension_semantics<parallel>, #tpu.dimension_semantics<parallel>], iteration_bounds = array<i64: 2, 2>, scalar_prefetch = 0 : i64, scratch_operands = 0 : i64, tpu.core_type = #tpu.core_type<tc>, window_params = [{transform_indices = @transform_0, window_bounds = array<i64: 1, 32, 128>}, {transform_indices = @transform_1, window_bounds = array<i64: 1, 32, 128>}, {pipeline_mode = #tpu.pipeline_mode<synchronous>, transform_indices = @transform_2, window_bounds = array<i64: 16, 32>}, {pipeline_mode = #tpu.pipeline_mode<synchronous>, transform_indices = @transform_3, window_bounds = array<i64: 16, 32>}, {pipeline_mode = #tpu.pipeline_mode<synchronous>, transform_indices = @transform_4, window_bounds = array<i64: 16, 1>}, {pipeline_mode = #tpu.pipeline_mode<synchronous>, transform_indices = @transform_5, window_bounds = array<i64: 16, 1>}, {pipeline_mode = #tpu.pipeline_mode<synchronous>, transform_indices = @transform_6, window_bounds = array<i64: 1, 1>}, {transform_indices = @transform_7, window_bounds = array<i64: 1, 32, 128>}]} {
    %c0 = arith.constant 0 : index
    %c0_0 = arith.constant 0 : index
    %c0_1 = arith.constant 0 : index
    %0 = vector.load %arg3[%c0, %c0_0, %c0_1] : memref<1x32x128xf32, #tpu.memory_space<vmem>>, vector<1x32x128xf32>
    %1 = vector.shape_cast %0 : vector<1x32x128xf32> to vector<32x128xf32>
    %c0_2 = arith.constant 0 : index
    %c0_3 = arith.constant 0 : index
    %2 = vector.load %arg4[%c0_2, %c0_3] : memref<16x32xbf16, #tpu.memory_space<vmem>>, vector<16x32xbf16>
    %c0_4 = arith.constant 0 : index
    %c0_5 = arith.constant 0 : index
    %c0_6 = arith.constant 0 : index
    %3 = vector.load %arg2[%c0_4, %c0_5, %c0_6] : memref<1x32x128xf32, #tpu.memory_space<vmem>>, vector<1x32x128xf32>
    %4 = vector.shape_cast %3 : vector<1x32x128xf32> to vector<32x128xf32>
    %5 = arith.truncf %4 : vector<32x128xf32> to vector<32x128xbf16>
    %cst = arith.constant dense<0.000000e+00> : vector<16x128xf32>
    %6 = tpu.matmul %2, %5, %cst {dimension_numbers = #tpu.dot_dimension_numbers<[1], [0], [0], [1], [0, 0, 1, 1], [], []>} : vector<16x32xbf16>, vector<32x128xbf16>, vector<16x128xf32> -> vector<16x128xf32>
    %c0_7 = arith.constant 0 : index
    %c0_8 = arith.constant 0 : index
    %7 = vector.load %arg5[%c0_7, %c0_8] : memref<16x32xbf16, #tpu.memory_space<vmem>>, vector<16x32xbf16>
    %8 = arith.truncf %1 : vector<32x128xf32> to vector<32x128xbf16>
    %cst_9 = arith.constant dense<0.000000e+00> : vector<16x128xf32>
    %9 = tpu.matmul %7, %8, %cst_9 {dimension_numbers = #tpu.dot_dimension_numbers<[1], [0], [0], [1], [0, 0, 1, 1], [], []>} : vector<16x32xbf16>, vector<32x128xbf16>, vector<16x128xf32> -> vector<16x128xf32>
    %10 = arith.addf %6, %9 : vector<16x128xf32>
    %c0_10 = arith.constant 0 : index
    %c0_11 = arith.constant 0 : index
    %11 = vector.load %arg6[%c0_10, %c0_11] : memref<16x1xf32, #tpu.memory_space<vmem>>, vector<16x1xf32>
    %12 = vector.broadcast %11 : vector<16x1xf32> to vector<16x128xf32>
    %13 = arith.addf %10, %12 : vector<16x128xf32>
    %cst_12 = arith.constant 0.000000e+00 : f32
    %14 = vector.broadcast %cst_12 : f32 to vector<16x128xf32>
    %15 = arith.maximumf %13, %14 : vector<16x128xf32>
    %c0_13 = arith.constant 0 : index
    %c0_14 = arith.constant 0 : index
    %16 = vector.load %arg7[%c0_13, %c0_14] : memref<16x1xf32, #tpu.memory_space<vmem>>, vector<16x1xf32>
    %17 = vector.broadcast %16 : vector<16x1xf32> to vector<16x128xf32>
    %18 = arith.mulf %15, %17 : vector<16x128xf32>
    %cst_15 = arith.constant dense<0.000000e+00> : vector<128xf32>
    %19 = vector.multi_reduction <add>, %18, %cst_15 [0] : vector<16x128xf32> to vector<128xf32>
    %20 = vector.shape_cast %19 : vector<128xf32> to vector<1x128xf32>
    %c0_16 = arith.constant 0 : index
    %c0_17 = arith.constant 0 : index
    %21 = vector.load %arg8[%c0_16, %c0_17] : memref<1x1xf32, #tpu.memory_space<vmem>>, vector<1x1xf32>
    %22 = vector.broadcast %21 : vector<1x1xf32> to vector<1x128xf32>
    %23 = arith.addf %20, %22 : vector<1x128xf32>
    %24 = arith.negf %23 : vector<1x128xf32>
    %25 = math.exp %24 : vector<1x128xf32>
    %cst_18 = arith.constant 1.000000e+00 : f32
    %26 = vector.broadcast %cst_18 : f32 to vector<1x128xf32>
    %27 = arith.addf %26, %25 : vector<1x128xf32>
    %28 = arith.divf %26, %27 : vector<1x128xf32>
    %29 = vector.broadcast %28 : vector<1x128xf32> to vector<32x128xf32>
    %30 = arith.mulf %1, %29 : vector<32x128xf32>
    %c0_19 = arith.constant 0 : index
    %c0_20 = arith.constant 0 : index
    %c0_21 = arith.constant 0 : index
    %31 = vector.load %arg9[%c0_19, %c0_20, %c0_21] : memref<1x32x128xf32, #tpu.memory_space<vmem>>, vector<1x32x128xf32>
    %32 = vector.shape_cast %31 : vector<1x32x128xf32> to vector<32x128xf32>
    %33 = vector.shape_cast %30 : vector<32x128xf32> to vector<1x32x128xf32>
    tpu.vector_store %arg9[%c0_19, %c0_20, %c0_21], %33 {strides = array<i32>} : memref<1x32x128xf32, #tpu.memory_space<vmem>>, vector<1x32x128xf32>,
    return
  }
  func.func @transform_0(%arg0: i32, %arg1: i32) -> (i32, i32, i32) {
    %c0_i32 = arith.constant 0 : i32
    %c0_i32_0 = arith.constant 0 : i32
    return %arg0, %c0_i32, %arg1 : i32, i32, i32
  }
  func.func @transform_1(%arg0: i32, %arg1: i32) -> (i32, i32, i32) {
    %c0_i32 = arith.constant 0 : i32
    %c0_i32_0 = arith.constant 0 : i32
    return %arg0, %c0_i32, %arg1 : i32, i32, i32
  }
  func.func @transform_2(%arg0: i32, %arg1: i32) -> (i32, i32) {
    %c0_i32 = arith.constant 0 : i32
    %c0_i32_0 = arith.constant 0 : i32
    %c0_i32_1 = arith.constant 0 : i32
    return %c0_i32, %c0_i32_0 : i32, i32
  }
  func.func @transform_3(%arg0: i32, %arg1: i32) -> (i32, i32) {
    %c0_i32 = arith.constant 0 : i32
    %c0_i32_0 = arith.constant 0 : i32
    %c0_i32_1 = arith.constant 0 : i32
    return %c0_i32, %c0_i32_0 : i32, i32
  }
  func.func @transform_4(%arg0: i32, %arg1: i32) -> (i32, i32) {
    %c0_i32 = arith.constant 0 : i32
    %c0_i32_0 = arith.constant 0 : i32
    %c0_i32_1 = arith.constant 0 : i32
    return %c0_i32, %c0_i32_0 : i32, i32
  }
  func.func @transform_5(%arg0: i32, %arg1: i32) -> (i32, i32) {
    %c0_i32 = arith.constant 0 : i32
    %c0_i32_0 = arith.constant 0 : i32
    %c0_i32_1 = arith.constant 0 : i32
    return %c0_i32, %c0_i32_0 : i32, i32
  }
  func.func @transform_6(%arg0: i32, %arg1: i32) -> (i32, i32) {
    %c0_i32 = arith.constant 0 : i32
    %c0_i32_0 = arith.constant 0 : i32
    %c0_i32_1 = arith.constant 0 : i32
    return %c0_i32, %c0_i32_0 : i32, i32
  }
  func.func @transform_7(%arg0: i32, %arg1: i32) -> (i32, i32, i32) {
    %c0_i32 = arith.constant 0 : i32
    %c0_i32_0 = arith.constant 0 : i32
    return %arg0, %c0_i32, %arg1 : i32, i32, i32
  }
}

</mosaic_0001>

<llo_original>
// kernel: attention_block_forward.1
$region0: #{attention_block_forward.1}
  #allocation0 [shape = 'u32[]', space=smem, size = 0x4, offset = 0x4, fixed_abs, tag = 'smem constant byte address 0x4 - core index']
  #allocation1 [shape = 'u32[72,128]{1,0:T(1,128)}', space=vmem, size = 0x9000, scoped, tag = 'internal scratch']
  #allocation2 [shape = 'f32[1,1]{1,0:T(1,128)S(1)}', space=vmem, size = 0x200, scoped, tag = 'scoped memory for attention_block_forward.1']
  %s0 = inlined_call_operand.vmem [shape: f32[2,32,256], index: 0, kind: input, shape index: {}]
  %s1 = inlined_call_operand.vmem [shape: f32[2,32,256], index: 1, kind: input, shape index: {}]
  %s2 = inlined_call_operand.vmem [shape: bf16[16,32], index: 2, kind: input, shape index: {}]
  %s3 = inlined_call_operand.vmem [shape: bf16[16,32], index: 3, kind: input, shape index: {}]
  %s4 = inlined_call_operand.vmem [shape: f32[16,1], index: 4, kind: input, shape index: {}]
  %s5 = inlined_call_operand.vmem [shape: f32[16,1], index: 5, kind: input, shape index: {}]
  %s6 = inlined_call_operand.<no memory space> [shape: f32[1,1], index: 6, kind: input, shape index: {}]
  %s7 = inlined_call_operand.vmem [shape: f32[2,32,256], index: 7, kind: output, shape index: {}]
  %s8 = sld [smem:[#allocation0]]
  $region171: #{attention_block_forward.1} parent=0
    _
  %s10 = ssub.s32 1, %s8
  %s11 = scalar_select 0, %s10, %s8
  %v12 = vstv %s6
  %13 = vst [vmem:[#allocation2] sm:$0x1] %v12
  $region1: #{attention_block_forward.1} parent=0
    #allocation3 [shape = 'u8[32768]{0}', space=vmem, size = 0x8000, scoped, tag = 'input window, operand 0']
    #allocation4 [shape = 'u8[32768]{0}', space=vmem, size = 0x8000, scoped, tag = 'input window, operand 1']
    #allocation5 [shape = 'u8[32768]{0}', space=vmem, size = 0x8000, scoped, tag = 'output window, operand 0']
    loop: start=0, step=1, limit=6
    $region2: #{attention_block_forward.1} parent=1 // loop_pre_header
      _
    $region3: #{attention_block_forward.1} parent=1 // loop_header
      %s15 = sphi 0, %s19
      %p16 = scmp.ge.s32.totalorder %s15, 6
      %s22 = sphi 0, %s34
      %s23 = sphi 0, %s30
      %s24 = sphi 0, %s22
      %s25 = sphi 0, %s23
      %s26 = sphi 0, %s24
      %s27 = sphi 0, %s25
      %s39 = sphi 0, %s41
      %s42 = sphi 0, %s39
      %s43 = sphi 0, %s42
      %s59 = sphi 0, %s43
      %s67 = sphi 0, %s69
      %s70 = sphi 0, %s67
      %s71 = sphi 0, %s70
      %s87 = sphi 0, %s71
      %s91 = sphi 0, %s91
      %s93 = sphi 0, %s91
      %s94 = sphi 0, %s93
      %s108 = sphi 0, %s94
      %s112 = sphi 0, %s112
      %s114 = sphi 0, %s112
      %s115 = sphi 0, %s114
      %s129 = sphi 0, %s115
      %s133 = sphi 0, %s133
      %s135 = sphi 0, %s133
      %s136 = sphi 0, %s135
      %s150 = sphi 0, %s136
      %s154 = sphi 0, %s154
      %s156 = sphi 0, %s154
      %s157 = sphi 0, %s156
      %s171 = sphi 0, %s157
      %s175 = sphi 0, %s175
      %s177 = sphi 0, %s175
      %s178 = sphi 0, %s177
      %s192 = sphi 0, %s178
      %s200 = sphi 0, %s202
      %s203 = sphi 0, %s200
      %s204 = sphi 0, %s203
      %s220 = sphi 0, %s204
    $region4: #{attention_block_forward.1} parent=1 // loop_header_branch
      %18 = sbr.rel (%p16) target = $region8
    $region5: #{attention_block_forward.1} parent=1 // loop_body
      %s20 = ssub.s32 %s15, 1
      %s21 = ssub.s32 %s15, 2
      %s28 = sadd.s32 1, %s23
      %p29 = scmp.ge.s32.totalorder %s28, 2
      %s30 = scalar_select %p29, 0, %s28
      %s31 = sadd.s32 1, %s22
      %s32 = scalar_select %p29, %s31, %s22
      %p33 = scmp.ge.s32.totalorder %s32, 2
      %s34 = scalar_select %p33, 0, %s32
      %s35 = ssub.s32 %s22, %s34
      %s36 = ssub.s32 %s23, %s30
      %s37 = sor.u32 %s35, %s36
      %p38 = scmp.eq.s32.totalorder %s37, 0
      %s40 = sadd.s32 %s39, 1
      %s41 = scalar_select %p38, %s39, %s40
      %p44 = pneg %p38
      %p45 = scmp.eq.s32.totalorder %s15, 3
      %p46 = por %p44, %p45
      %p47 = scmp.ne.s32.totalorder %s39, %s42
      %p48 = scmp.eq.s32.totalorder %s15, 0
      %p49 = por %p47, %p48
      %p50 = scmp.ne.s32.totalorder %s39, %s42
      %p51 = scmp.eq.s32.totalorder %s20, 3
      %p52 = por %p50, %p51
      %p53 = scmp.ne.s32.totalorder %s42, %s43
      %p54 = scmp.eq.s32.totalorder %s20, 0
      %p55 = por %p53, %p54
      %p56 = scmp.ne.s32.totalorder %s42, %s43
      %p57 = scmp.eq.s32.totalorder %s21, 3
      %p58 = por %p56, %p57
      %p60 = scmp.ne.s32.totalorder %s43, %s59
      %p61 = scmp.eq.s32.totalorder %s21, 0
      %p62 = por %p60, %p61
      %s63 = ssub.s32 %s22, %s34
      %s64 = ssub.s32 %s23, %s30
      %s65 = sor.u32 %s63, %s64
      %p66 = scmp.eq.s32.totalorder %s65, 0
      %s68 = sadd.s32 %s67, 1
      %s69 = scalar_select %p66, %s67, %s68
      %p72 = pneg %p66
      %p73 = scmp.eq.s32.totalorder %s15, 3
      %p74 = por %p72, %p73
      %p75 = scmp.ne.s32.totalorder %s67, %s70
      %p76 = scmp.eq.s32.totalorder %s15, 0
      %p77 = por %p75, %p76
      %p78 = scmp.ne.s32.totalorder %s67, %s70
      %p79 = scmp.eq.s32.totalorder %s20, 3
      %p80 = por %p78, %p79
      %p81 = scmp.ne.s32.totalorder %s70, %s71
      %p82 = scmp.eq.s32.totalorder %s20, 0
      %p83 = por %p81, %p82
      %p84 = scmp.ne.s32.totalorder %s70, %s71
      %p85 = scmp.eq.s32.totalorder %s21, 3
      %p86 = por %p84, %p85
      %p88 = scmp.ne.s32.totalorder %s71, %s87
      %p89 = scmp.eq.s32.totalorder %s21, 0
      %p90 = por %p88, %p89
      %s92 = sadd.s32 %s91, 1
      %p95 = scmp.eq.s32.totalorder %s15, 3
      %p96 = scmp.ne.s32.totalorder %s91, %s93
      %p97 = scmp.eq.s32.totalorder %s15, 0
      %p98 = por %p96, %p97
      %p99 = scmp.ne.s32.totalorder %s91, %s93
      %p100 = scmp.eq.s32.totalorder %s20, 3
      %p101 = por %p99, %p100
      %p102 = scmp.ne.s32.totalorder %s93, %s94
      %p103 = scmp.eq.s32.totalorder %s20, 0
      %p104 = por %p102, %p103
      %p105 = scmp.ne.s32.totalorder %s93, %s94
      %p106 = scmp.eq.s32.totalorder %s21, 3
      %p107 = por %p105, %p106
      %p109 = scmp.ne.s32.totalorder %s94, %s108
      %p110 = scmp.eq.s32.totalorder %s21, 0
      %p111 = por %p109, %p110
      %s113 = sadd.s32 %s112, 1
      %p116 = scmp.eq.s32.totalorder %s15, 3
      %p117 = scmp.ne.s32.totalorder %s112, %s114
      %p118 = scmp.eq.s32.totalorder %s15, 0
      %p119 = por %p117, %p118
      %p120 = scmp.ne.s32.totalorder %s112, %s114
      %p121 = scmp.eq.s32.totalorder %s20, 3
      %p122 = por %p120, %p121
      %p123 = scmp.ne.s32.totalorder %s114, %s115
      %p124 = scmp.eq.s32.totalorder %s20, 0
      %p125 = por %p123, %p124
      %p126 = scmp.ne.s32.totalorder %s114, %s115
      %p127 = scmp.eq.s32.totalorder %s21, 3
      %p128 = por %p126, %p127
      %p130 = scmp.ne.s32.totalorder %s115, %s129
      %p131 = scmp.eq.s32.totalorder %s21, 0
      %p132 = por %p130, %p131
      %s134 = sadd.s32 %s133, 1
      %p137 = scmp.eq.s32.totalorder %s15, 3
      %p138 = scmp.ne.s32.totalorder %s133, %s135
      %p139 = scmp.eq.s32.totalorder %s15, 0
      %p140 = por %p138, %p139
      %p141 = scmp.ne.s32.totalorder %s133, %s135
      %p142 = scmp.eq.s32.totalorder %s20, 3
      %p143 = por %p141, %p142
      %p144 = scmp.ne.s32.totalorder %s135, %s136
      %p145 = scmp.eq.s32.totalorder %s20, 0
      %p146 = por %p144, %p145
      %p147 = scmp.ne.s32.totalorder %s135, %s136
      %p148 = scmp.eq.s32.totalorder %s21, 3
      %p149 = por %p147, %p148
      %p151 = scmp.ne.s32.totalorder %s136, %s150
      %p152 = scmp.eq.s32.totalorder %s21, 0
      %p153 = por %p151, %p152
      %s155 = sadd.s32 %s154, 1
      %p158 = scmp.eq.s32.totalorder %s15, 3
      %p159 = scmp.ne.s32.totalorder %s154, %s156
      %p160 = scmp.eq.s32.totalorder %s15, 0
      %p161 = por %p159, %p160
      %p162 = scmp.ne.s32.totalorder %s154, %s156
      %p163 = scmp.eq.s32.totalorder %s20, 3
      %p164 = por %p162, %p163
      %p165 = scmp.ne.s32.totalorder %s156, %s157
      %p166 = scmp.eq.s32.totalorder %s20, 0
      %p167 = por %p165, %p166
      %p168 = scmp.ne.s32.totalorder %s156, %s157
      %p169 = scmp.eq.s32.totalorder %s21, 3
      %p170 = por %p168, %p169
      %p172 = scmp.ne.s32.totalorder %s157, %s171
      %p173 = scmp.eq.s32.totalorder %s21, 0
      %p174 = por %p172, %p173
      %s176 = sadd.s32 %s175, 1
      %p179 = scmp.eq.s32.totalorder %s15, 3
      %p180 = scmp.ne.s32.totalorder %s175, %s177
      %p181 = scmp.eq.s32.totalorder %s15, 0
      %p182 = por %p180, %p181
      %p183 = scmp.ne.s32.totalorder %s175, %s177
      %p184 = scmp.eq.s32.totalorder %s20, 3
      %p185 = por %p183, %p184
      %p186 = scmp.ne.s32.totalorder %s177, %s178
      %p187 = scmp.eq.s32.totalorder %s20, 0
      %p188 = por %p186, %p187
      %p189 = scmp.ne.s32.totalorder %s177, %s178
      %p190 = scmp.eq.s32.totalorder %s21, 3
      %p191 = por %p189, %p190
      %p193 = scmp.ne.s32.totalorder %s178, %s192
      %p194 = scmp.eq.s32.totalorder %s21, 0
      %p195 = por %p193, %p194
      %s196 = ssub.s32 %s22, %s34
      %s197 = ssub.s32 %s23, %s30
      %s198 = sor.u32 %s196, %s197
      %p199 = scmp.eq.s32.totalorder %s198, 0
      %s201 = sadd.s32 %s200, 1
      %s202 = scalar_select %p199, %s200, %s201
      %p205 = pneg %p199
      %p206 = scmp.eq.s32.totalorder %s15, 3
      %p207 = por %p205, %p206
      %p208 = scmp.ne.s32.totalorder %s200, %s203
      %p209 = scmp.eq.s32.totalorder %s15, 0
      %p210 = por %p208, %p209
      %p211 = scmp.ne.s32.totalorder %s200, %s203
      %p212 = scmp.eq.s32.totalorder %s20, 3
      %p213 = por %p211, %p212
      %p214 = scmp.ne.s32.totalorder %s203, %s204
      %p215 = scmp.eq.s32.totalorder %s20, 0
      %p216 = por %p214, %p215
      %p217 = scmp.ne.s32.totalorder %s203, %s204
      %p218 = scmp.eq.s32.totalorder %s21, 3
      %p219 = por %p217, %p218
      %p221 = scmp.ne.s32.totalorder %s204, %s220
      %p222 = scmp.eq.s32.totalorder %s21, 0
      %p223 = por %p221, %p222
      %p224 = scmp.le.s32.totalorder 1, %s15
      %p225 = scmp.lt.s32.totalorder %s15, 5
      %p226 = pnand %p224, %p225
      %p227 = pneg %p226
      // Predicated region
      $region9: #{attention_block_forward.1} parent=5 // pred_check
        _
      $region10: #{attention_block_forward.1} parent=5 // pred_check_branch
        %229 = sbr.rel (%p226) target = $region12
      $region11: #{attention_block_forward.1} parent=5 // pred_region
        %s230 = ssub.s32 %s15, 1
        // Predicated region
        $region13: #{attention_block_forward.1} parent=11 // pred_check
          %p231 = pneg %p104
        $region14: #{attention_block_forward.1} parent=11 // pred_check_branch
          %233 = sbr.rel (%p231) target = $region16
        $region15: #{attention_block_forward.1} parent=11 // pred_region
          _
        $region16: #{attention_block_forward.1} parent=11 // pred_fallthru
          _
        // Predicated region
        $region17: #{attention_block_forward.1} parent=11 // pred_check
          %p234 = pneg %p125
        $region18: #{attention_block_forward.1} parent=11 // pred_check_branch
          %236 = sbr.rel (%p234) target = $region20
        $region19: #{attention_block_forward.1} parent=11 // pred_region
          _
        $region20: #{attention_block_forward.1} parent=11 // pred_fallthru
          _
        // Predicated region
        $region21: #{attention_block_forward.1} parent=11 // pred_check
          %p237 = pneg %p146
        $region22: #{attention_block_forward.1} parent=11 // pred_check_branch
          %239 = sbr.rel (%p237) target = $region24
        $region23: #{attention_block_forward.1} parent=11 // pred_region
          _
        $region24: #{attention_block_forward.1} parent=11 // pred_fallthru
          _
        // Predicated region
        $region25: #{attention_block_forward.1} parent=11 // pred_check
          %p240 = pneg %p167
        $region26: #{attention_block_forward.1} parent=11 // pred_check_branch
          %242 = sbr.rel (%p240) target = $region28
        $region27: #{attention_block_forward.1} parent=11 // pred_region
          _
        $region28: #{attention_block_forward.1} parent=11 // pred_fallthru
          _
        // Predicated region
        $region29: #{attention_block_forward.1} parent=11 // pred_check
          %p243 = pneg %p188
        $region30: #{attention_block_forward.1} parent=11 // pred_check_branch
          %245 = sbr.rel (%p243) target = $region32
        $region31: #{attention_block_forward.1} parent=11 // pred_region
          _
        $region32: #{attention_block_forward.1} parent=11 // pred_fallthru
          _
      $region12: #{attention_block_forward.1} parent=5 // pred_fallthru
        _
      %p246 = scmp.lt.s32.totalorder %s15, 4
      // Predicated region
      $region33: #{attention_block_forward.1} parent=5 // pred_check
        %p247 = pneg %p246
      $region34: #{attention_block_forward.1} parent=5 // pred_check_branch
        %249 = sbr.rel (%p247) target = $region36
      $region35: #{attention_block_forward.1} parent=5 // pred_region
        // Predicated region
        $region37: #{attention_block_forward.1} parent=35 // pred_check
          %p250 = pneg %p49
        $region38: #{attention_block_forward.1} parent=35 // pred_check_branch
          %252 = sbr.rel (%p250) target = $region40
        $region39: #{attention_block_forward.1} parent=35 // pred_region
          %s253 = sand.u32 %s39, 1
          %s254 = sand.u32 %s39, 1
          %s255 = smul.addr %s254, 32
          %s256 = scalar_lea.vmem [#allocation3], %s255
          %s257 = smul.addr %s22, 8
          %s258 = sadd.s32 %s23, %s257
          %s259 = smul.addr %s258, 8
          %s260 = scalar_lea.vmem %s0, %s259
          // Predicated region
          $region41: #{attention_block_forward.1} parent=39 // pred_check
            _
          $region42: #{attention_block_forward.1} parent=39 // pred_check_branch
            %262 = sbr.rel (0) target = $region44
          $region43: #{attention_block_forward.1} parent=39 // pred_region
            // Predicated region
            $region45: #{attention_block_forward.1} parent=43 // pred_check
              _
            $region46: #{attention_block_forward.1} parent=43 // pred_check_branch
              %264 = sbr.rel (0) target = $region48
            $region47: #{attention_block_forward.1} parent=43 // pred_region
              // Predicated region
              $region60: #{attention_block_forward.1} parent=47 // pred_check
                _
              $region61: #{attention_block_forward.1} parent=47 // pred_check_branch
                %286 = sbr.rel (0) target = $region63
              $region62: #{attention_block_forward.1} parent=47 // pred_region
                loop: start=0, step=1, limit=1
                $region64: #{attention_block_forward.1} parent=62 // loop_pre_header
                  _
                $region65: #{attention_block_forward.1} parent=62 // loop_header
                  %s288 = sphi 0, %s292
                  %p289 = scmp.ge.s32.totalorder %s288, 1
                  %s293 = sphi %s260, %s260
                  %s294 = sphi %s256, %s256
                $region66: #{attention_block_forward.1} parent=62 // loop_header_branch
                  %291 = sbr.rel (%p289) target = $region70
                $region67: #{attention_block_forward.1} parent=62 // loop_body
                  %v295 = vld [vmem:[%s293] sm:$0xff]
                  %296 = vst [vmem:[%s294] sm:$0xff] %v295
                  %v297 = vld [vmem:[%s293 + $0x10] sm:$0xff]
                  %298 = vst [vmem:[%s294 + $0x8] sm:$0xff] %v297
                  %v299 = vld [vmem:[%s293 + $0x20] sm:$0xff]
                  %300 = vst [vmem:[%s294 + $0x10] sm:$0xff] %v299
                  %v301 = vld [vmem:[%s293 + $0x30] sm:$0xff]
                  %302 = vst [vmem:[%s294 + $0x18] sm:$0xff] %v301
                $region68: #{attention_block_forward.1} parent=62 // loop_footer
                  %s292 = sadd.s32 1, %s288
                $region69: #{attention_block_forward.1} parent=62 // loop_footer_branch
                  %287 = sbr.rel target = $region65
                $region70: #{attention_block_forward.1} parent=62 // loop_exit
                  _
              $region63: #{attention_block_forward.1} parent=47 // pred_fallthru
                _
              // Predicated region
              $region71: #{attention_block_forward.1} parent=47 // pred_check
                _
              $region72: #{attention_block_forward.1} parent=47 // pred_check_branch
                %304 = sbr.rel target = $region74
              $region73: #{attention_block_forward.1} parent=47 // pred_region
                _
              $region74: #{attention_block_forward.1} parent=47 // pred_fallthru
                _
            $region48: #{attention_block_forward.1} parent=43 // pred_fallthru
              _
            // Predicated region
            $region49: #{attention_block_forward.1} parent=43 // pred_check
              _
            $region50: #{attention_block_forward.1} parent=43 // pred_check_branch
              %266 = sbr.rel target = $region52
            $region51: #{attention_block_forward.1} parent=43 // pred_region
              %s268 = ssub.s32 256, 1
              loop: start=0, step=1, limit=1
              $region53: #{attention_block_forward.1} parent=51 // loop_pre_header
                _
              $region54: #{attention_block_forward.1} parent=51 // loop_header
                %s270 = sphi 0, %s274
                %p271 = scmp.ge.s32.totalorder %s270, 1
                %s275 = sphi %s260, %s260
                %s276 = sphi %s256, %s256
              $region55: #{attention_block_forward.1} parent=51 // loop_header_branch
                %273 = sbr.rel (%p271) target = $region59
              $region56: #{attention_block_forward.1} parent=51 // loop_body
                %v277 = vld [vmem:[%s275] sm:%s268]
                %278 = vst [vmem:[%s276] sm:%s268] %v277
                %v279 = vld [vmem:[%s275 + $0x10] sm:%s268]
                %280 = vst [vmem:[%s276 + $0x8] sm:%s268] %v279
                %v281 = vld [vmem:[%s275 + $0x20] sm:%s268]
                %282 = vst [vmem:[%s276 + $0x10] sm:%s268] %v281
                %v283 = vld [vmem:[%s275 + $0x30] sm:%s268]
                %284 = vst [vmem:[%s276 + $0x18] sm:%s268] %v283
              $region57: #{attention_block_forward.1} parent=51 // loop_footer
                %s274 = sadd.s32 1, %s270
              $region58: #{attention_block_forward.1} parent=51 // loop_footer_branch
                %269 = sbr.rel target = $region54
              $region59: #{attention_block_forward.1} parent=51 // loop_exit
                _
            $region52: #{attention_block_forward.1} parent=43 // pred_fallthru
              _
          $region44: #{attention_block_forward.1} parent=39 // pred_fallthru
            _
          %305 = vnop
        $region40: #{attention_block_forward.1} parent=35 // pred_fallthru
          _
        // Predicated region
        $region75: #{attention_block_forward.1} parent=35 // pred_check
          %p306 = pneg %p77
        $region76: #{attention_block_forward.1} parent=35 // pred_check_branch
          %308 = sbr.rel (%p306) target = $region78
        $region77: #{attention_block_forward.1} parent=35 // pred_region
          %s309 = sand.u32 %s67, 1
          %s310 = sand.u32 %s67, 1
          %s311 = smul.addr %s310, 32
          %s312 = scalar_lea.vmem [#allocation4], %s311
          %s313 = smul.addr %s22, 8
          %s314 = sadd.s32 %s23, %s313
          %s315 = smul.addr %s314, 8
          %s316 = scalar_lea.vmem %s1, %s315
          // Predicated region
          $region79: #{attention_block_forward.1} parent=77 // pred_check
            _
          $region80: #{attention_block_forward.1} parent=77 // pred_check_branch
            %318 = sbr.rel (0) target = $region82
          $region81: #{attention_block_forward.1} parent=77 // pred_region
            // Predicated region
            $region83: #{attention_block_forward.1} parent=81 // pred_check
              _
            $region84: #{attention_block_forward.1} parent=81 // pred_check_branch
              %320 = sbr.rel (0) target = $region86
            $region85: #{attention_block_forward.1} parent=81 // pred_region
              // Predicated region
              $region98: #{attention_block_forward.1} parent=85 // pred_check
                _
              $region99: #{attention_block_forward.1} parent=85 // pred_check_branch
                %342 = sbr.rel (0) target = $region101
              $region100: #{attention_block_forward.1} parent=85 // pred_region
                loop: start=0, step=1, limit=1
                $region102: #{attention_block_forward.1} parent=100 // loop_pre_header
                  _
                $region103: #{attention_block_forward.1} parent=100 // loop_header
                  %s344 = sphi 0, %s348
                  %p345 = scmp.ge.s32.totalorder %s344, 1
                  %s349 = sphi %s316, %s316
                  %s350 = sphi %s312, %s312
                $region104: #{attention_block_forward.1} parent=100 // loop_header_branch
                  %347 = sbr.rel (%p345) target = $region108
                $region105: #{attention_block_forward.1} parent=100 // loop_body
                  %v351 = vld [vmem:[%s349] sm:$0xff]
                  %352 = vst [vmem:[%s350] sm:$0xff] %v351
                  %v353 = vld [vmem:[%s349 + $0x10] sm:$0xff]
                  %354 = vst [vmem:[%s350 + $0x8] sm:$0xff] %v353
                  %v355 = vld [vmem:[%s349 + $0x20] sm:$0xff]
                  %356 = vst [vmem:[%s350 + $0x10] sm:$0xff] %v355
                  %v357 = vld [vmem:[%s349 + $0x30] sm:$0xff]
                  %358 = vst [vmem:[%s350 + $0x18] sm:$0xff] %v357
                $region106: #{attention_block_forward.1} parent=100 // loop_footer
                  %s348 = sadd.s32 1, %s344
                $region107: #{attention_block_forward.1} parent=100 // loop_footer_branch
                  %343 = sbr.rel target = $region103
                $region108: #{attention_block_forward.1} parent=100 // loop_exit
                  _
              $region101: #{attention_block_forward.1} parent=85 // pred_fallthru
                _
              // Predicated region
              $region109: #{attention_block_forward.1} parent=85 // pred_check
                _
              $region110: #{attention_block_forward.1} parent=85 // pred_check_branch
                %360 = sbr.rel target = $region112
              $region111: #{attention_block_forward.1} parent=85 // pred_region
                _
              $region112: #{attention_block_forward.1} parent=85 // pred_fallthru
                _
            $region86: #{attention_block_forward.1} parent=81 // pred_fallthru
              _
            // Predicated region
            $region87: #{attention_block_forward.1} parent=81 // pred_check
              _
            $region88: #{attention_block_forward.1} parent=81 // pred_check_branch
              %322 = sbr.rel target = $region90
            $region89: #{attention_block_forward.1} parent=81 // pred_region
              %s324 = ssub.s32 256, 1
              loop: start=0, step=1, limit=1
              $region91: #{attention_block_forward.1} parent=89 // loop_pre_header
                _
              $region92: #{attention_block_forward.1} parent=89 // loop_header
                %s326 = sphi 0, %s330
                %p327 = scmp.ge.s32.totalorder %s326, 1
                %s331 = sphi %s316, %s316
                %s332 = sphi %s312, %s312
              $region93: #{attention_block_forward.1} parent=89 // loop_header_branch
                %329 = sbr.rel (%p327) target = $region97
              $region94: #{attention_block_forward.1} parent=89 // loop_body
                %v333 = vld [vmem:[%s331] sm:%s324]
                %334 = vst [vmem:[%s332] sm:%s324] %v333
                %v335 = vld [vmem:[%s331 + $0x10] sm:%s324]
                %336 = vst [vmem:[%s332 + $0x8] sm:%s324] %v335
                %v337 = vld [vmem:[%s331 + $0x20] sm:%s324]
                %338 = vst [vmem:[%s332 + $0x10] sm:%s324] %v337
                %v339 = vld [vmem:[%s331 + $0x30] sm:%s324]
                %340 = vst [vmem:[%s332 + $0x18] sm:%s324] %v339
              $region95: #{attention_block_forward.1} parent=89 // loop_footer
                %s330 = sadd.s32 1, %s326
              $region96: #{attention_block_forward.1} parent=89 // loop_footer_branch
                %325 = sbr.rel target = $region92
              $region97: #{attention_block_forward.1} parent=89 // loop_exit
                _
            $region90: #{attention_block_forward.1} parent=81 // pred_fallthru
              _
          $region82: #{attention_block_forward.1} parent=77 // pred_fallthru
            _
          %361 = vnop
        $region78: #{attention_block_forward.1} parent=35 // pred_fallthru
          _
      $region36: #{attention_block_forward.1} parent=5 // pred_fallthru
        _
      %p362 = scmp.le.s32.totalorder 1, %s15
      %p363 = scmp.lt.s32.totalorder %s15, 5
      %p364 = pnand %p362, %p363
      %p365 = pneg %p364
      // Predicated region
      $region113: #{attention_block_forward.1} parent=5 // pred_check
        _
      $region114: #{attention_block_forward.1} parent=5 // pred_check_branch
        %367 = sbr.rel (%p364) target = $region116
      $region115: #{attention_block_forward.1} parent=5 // pred_region
        %s368 = ssub.s32 %s15, 1
        %s369 = sand.u32 %s42, 1
        %s370 = sand.u32 %s42, 1
        %s371 = smul.addr %s370, 32
        %s372 = scalar_lea.vmem [#allocation3], %s371
        // Predicated region
        $region117: #{attention_block_forward.1} parent=115 // pred_check
          %p373 = pneg %p55
        $region118: #{attention_block_forward.1} parent=115 // pred_check_branch
          %375 = sbr.rel (%p373) target = $region120
        $region119: #{attention_block_forward.1} parent=115 // pred_region
          _
        $region120: #{attention_block_forward.1} parent=115 // pred_fallthru
          _
        %s376 = sand.u32 %s70, 1
        %s377 = sand.u32 %s70, 1
        %s378 = smul.addr %s377, 32
        %s379 = scalar_lea.vmem [#allocation4], %s378
        // Predicated region
        $region121: #{attention_block_forward.1} parent=115 // pred_check
          %p380 = pneg %p83
        $region122: #{attention_block_forward.1} parent=115 // pred_check_branch
          %382 = sbr.rel (%p380) target = $region124
        $region123: #{attention_block_forward.1} parent=115 // pred_region
          _
        $region124: #{attention_block_forward.1} parent=115 // pred_fallthru
          _
        %s383 = sand.u32 %s42, 1
        %s384 = sand.u32 %s42, 1
        %s385 = smul.addr %s384, 32
        %s386 = scalar_lea.vmem [#allocation3], %s385
        %p387 = pneg %p55
        %p388 = pneg %p52
        %s389 = sand.u32 %s70, 1
        %s390 = sand.u32 %s70, 1
        %s391 = smul.addr %s390, 32
        %s392 = scalar_lea.vmem [#allocation4], %s391
        %p393 = pneg %p83
        %p394 = pneg %p80
        %p395 = pneg %p104
        %p396 = pneg %p101
        %p397 = pneg %p125
        %p398 = pneg %p122
        %p399 = pneg %p146
        %p400 = pneg %p143
        %p401 = pneg %p167
        %p402 = pneg %p164
        %p403 = pneg %p188
        %p404 = pneg %p185
        %p405 = pneg %p216
        %p406 = pneg %p213
        %s407 = sand.u32 %s203, 1
        %s408 = sand.u32 %s203, 1
        %s409 = smul.addr %s408, 32
        %s410 = scalar_lea.vmem [#allocation5], %s409
        %v412 = vld [vmem:[%s379] sm:$0xff]
        %v413 = vld [vmem:[%s379 + $0x8] sm:$0xff]
        %v414 = vld [vmem:[%s379 + $0x10] sm:$0xff]
        %v415 = vld [vmem:[%s379 + $0x18] sm:$0xff]
        %v416 = vld [vmem:[%s2] sm:$0xf]
        %v417 = vld [vmem:[%s2 + $0x4] sm:$0xf]
        %v418 = vld [vmem:[%s372] sm:$0xff]
        %v419 = vld [vmem:[%s372 + $0x8] sm:$0xff]
        %v420 = vld [vmem:[%s372 + $0x10] sm:$0xff]
        %v421 = vld [vmem:[%s372 + $0x18] sm:$0xff]
        %v422 = vpack.c.bf16 %v419, %v418
        %v423 = vpack.c.bf16 %v421, %v420
        %v424 = vld [vmem:[%s3] sm:$0xf]
        %v425 = vld [vmem:[%s3 + $0x4] sm:$0xf]
        %v426 = vpack.c.bf16 %v413, %v412
        %v427 = vpack.c.bf16 %v415, %v414
        %v430 = vunpack.c.l.b16 %v424
        %v431 = vunpack.c.l.b16 %v425
        %v432 = vpack.c.b16 %v431, %v430
        %vm433 = vcmask 261120
        %v435 = vsel %vm433, %v432, 0
        %437 = vmatpush.bf16.msra.mxu0 0
        %438 = vmatpush.bf16.msra.mxu0 0
        %439 = vmatpush.bf16.msra.mxu0 0
        %440 = vmatpush.bf16.msra.mxu0 0
        %441 = vmatpush.bf16.msra.mxu0 0
        %442 = vmatpush.bf16.msra.mxu0 0
        %443 = vmatpush.bf16.msra.mxu0 %v427
        %444 = vmatpush.bf16.msra.mxu0 %v426
        %445 = vmatmul.bf16.gmra.mxu0 %v435
        %v446 = vpop.f32.mrf.mxu0
        %v447 = vadd.f32 0.0, %v446
        %v448 = vpop.f32.mrf.mxu0
        %v449 = vadd.f32 0.0, %v448
        %450 = vdwg.mxu0
        %v453 = vunpack.c.l.b16 %v416
        %v454 = vunpack.c.l.b16 %v417
        %v455 = vpack.c.b16 %v454, %v453
        %v457 = vsel %vm433, %v455, 0
        %459 = vmatpush.bf16.msra.mxu0 0
        %460 = vmatpush.bf16.msra.mxu0 0
        %461 = vmatpush.bf16.msra.mxu0 0
        %462 = vmatpush.bf16.msra.mxu0 0
        %463 = vmatpush.bf16.msra.mxu0 0
        %464 = vmatpush.bf16.msra.mxu0 0
        %465 = vmatpush.bf16.msra.mxu0 %v423
        %466 = vmatpush.bf16.msra.mxu0 %v422
        %467 = vmatmul.bf16.gmra.mxu0 %v457
        %v468 = vpop.f32.mrf.mxu0
        %v469 = vadd.f32 %v447, %v468
        %v470 = vpop.f32.mrf.mxu0
        %v471 = vadd.f32 %v449, %v470
        %472 = vdwg.mxu0
        %v473 = vld [vmem:[%s4] sm:$0xff]
        %v474 = vld [vmem:[%s4 + $0x8] sm:$0xff]
        %476 = vset.pattern.permute.xlu0 0
        %477 = vperm.xlu0 %476, %v473
        %v478 = vpop.permute.xlu0 %477
        %481 = vset.pattern.permute.xlu0 0
        %482 = vperm.xlu0 %481, %v474
        %v483 = vpop.permute.xlu0 %482
        %v485 = vadd.f32 %v469, %v478
        %v486 = vadd.f32 %v471, %v483
        %v487 = vmax.f32 %v485, 0.0
        %v488 = vmax.f32 %v486, 0.0
        %v489 = vld [vmem:[%s5] sm:$0xff]
        %v490 = vld [vmem:[%s5 + $0x8] sm:$0xff]
        %492 = vset.pattern.permute.xlu0 0
        %493 = vperm.xlu0 %492, %v489
        %v494 = vpop.permute.xlu0 %493
        %497 = vset.pattern.permute.xlu0 0
        %498 = vperm.xlu0 %497, %v490
        %v499 = vpop.permute.xlu0 %498
        %v501 = vmul.f32 %v487, %v494
        %v502 = vmul.f32 %v488, %v499
        %v503 = vadd.f32 %v501, %v502
        %v504 = vrot.slane %v503, 4
        %v505 = vadd.f32 %v503, %v504
        %v506 = vrot.slane %v505, 2
        %v507 = vadd.f32 %v505, %v506
        %v508 = vrot.slane %v507, 1
        %v509 = vadd.f32 %v507, %v508
        %v510 = vld [vmem:[#allocation2] sm:$0x1]
        %512 = vset.pattern.permute.xlu0 0
        %513 = vperm.xlu0 %512, %v510
        %v514 = vpop.permute.xlu0 %513
        %v516 = vperm.slane %v514, 0
        %v517 = vadd.f32 %v509, %v516
        %v518 = vxor.u32 %v517, 2147483648
        %v519 = vmul.f32 %v518, 1.442695
        %v520 = vpow.pop %v519
        %v521 = vadd.f32 %v520, 1.0
        %v522 = vrcp.pop %v521
        %v523 = vmul.f32 %v521, %v522
        %v524 = vsub.f32 1.0, %v523
        %v525 = vmul.f32 %v522, %v524
        %v526 = vadd.f32 %v522, %v525
        %vm527 = vweird.f32 %v521
        %vm528 = vweird.f32 %v522
        %vm529 = vmor %vm527, %vm528
        %v530 = vsel %vm529, %v522, %v526
        %v531 = vand.u32 2147483647, %v521
        %vm532 = vcmp.eq.f32.partialorder %v531, 8.507059e+37
        %v533 = vand.u32 %v521, 2147483648
        %v534 = vor.u32 1.1754944e-38, %v533
        %v535 = vsel %vm532, %v534, %v530
        %v536 = vmul.f32 1.0, %v535
        %v537 = vmul.f32 %v412, %v536
        %v538 = vmul.f32 %v413, %v536
        %v539 = vmul.f32 %v414, %v536
        %v540 = vmul.f32 %v415, %v536
        %541 = vst [vmem:[%s410] sm:$0xff] %v537
        %542 = vst [vmem:[%s410 + $0x8] sm:$0xff] %v538
        %543 = vst [vmem:[%s410 + $0x10] sm:$0xff] %v539
        %544 = vst [vmem:[%s410 + $0x18] sm:$0xff] %v540
        %s545 = sand.u32 %s203, 1
        %s546 = sand.u32 %s203, 1
        %s547 = smul.addr %s546, 32
        %s548 = scalar_lea.vmem [#allocation5], %s547
        // Predicated region
        $region125: #{attention_block_forward.1} parent=115 // pred_check
          %p549 = pneg %p213
        $region126: #{attention_block_forward.1} parent=115 // pred_check_branch
          %551 = sbr.rel (%p549) target = $region128
        $region127: #{attention_block_forward.1} parent=115 // pred_region
          %s552 = smul.addr %s24, 8
          %s553 = sadd.s32 %s25, %s552
          %s554 = smul.addr %s553, 8
          %s555 = scalar_lea.vmem %s7, %s554
          // Predicated region
          $region129: #{attention_block_forward.1} parent=127 // pred_check
            _
          $region130: #{attention_block_forward.1} parent=127 // pred_check_branch
            %557 = sbr.rel (0) target = $region132
          $region131: #{attention_block_forward.1} parent=127 // pred_region
            // Predicated region
            $region133: #{attention_block_forward.1} parent=131 // pred_check
              _
            $region134: #{attention_block_forward.1} parent=131 // pred_check_branch
              %559 = sbr.rel (0) target = $region136
            $region135: #{attention_block_forward.1} parent=131 // pred_region
              // Predicated region
              $region148: #{attention_block_forward.1} parent=135 // pred_check
                _
              $region149: #{attention_block_forward.1} parent=135 // pred_check_branch
                %581 = sbr.rel (0) target = $region151
              $region150: #{attention_block_forward.1} parent=135 // pred_region
                loop: start=0, step=1, limit=1
                $region152: #{attention_block_forward.1} parent=150 // loop_pre_header
                  _
                $region153: #{attention_block_forward.1} parent=150 // loop_header
                  %s583 = sphi 0, %s587
                  %p584 = scmp.ge.s32.totalorder %s583, 1
                  %s588 = sphi %s548, %s548
                  %s589 = sphi %s555, %s555
                $region154: #{attention_block_forward.1} parent=150 // loop_header_branch
                  %586 = sbr.rel (%p584) target = $region158
                $region155: #{attention_block_forward.1} parent=150 // loop_body
                  %v590 = vld [vmem:[%s588] sm:$0xff]
                  %591 = vst [vmem:[%s589] sm:$0xff] %v590
                  %v592 = vld [vmem:[%s588 + $0x8] sm:$0xff]
                  %593 = vst [vmem:[%s589 + $0x10] sm:$0xff] %v592
                  %v594 = vld [vmem:[%s588 + $0x10] sm:$0xff]
                  %595 = vst [vmem:[%s589 + $0x20] sm:$0xff] %v594
                  %v596 = vld [vmem:[%s588 + $0x18] sm:$0xff]
                  %597 = vst [vmem:[%s589 + $0x30] sm:$0xff] %v596
                $region156: #{attention_block_forward.1} parent=150 // loop_footer
                  %s587 = sadd.s32 1, %s583
                $region157: #{attention_block_forward.1} parent=150 // loop_footer_branch
                  %582 = sbr.rel target = $region153
                $region158: #{attention_block_forward.1} parent=150 // loop_exit
                  _
              $region151: #{attention_block_forward.1} parent=135 // pred_fallthru
                _
              // Predicated region
              $region159: #{attention_block_forward.1} parent=135 // pred_check
                _
              $region160: #{attention_block_forward.1} parent=135 // pred_check_branch
                %599 = sbr.rel target = $region162
              $region161: #{attention_block_forward.1} parent=135 // pred_region
                _
              $region162: #{attention_block_forward.1} parent=135 // pred_fallthru
                _
            $region136: #{attention_block_forward.1} parent=131 // pred_fallthru
              _
            // Predicated region
            $region137: #{attention_block_forward.1} parent=131 // pred_check
              _
            $region138: #{attention_block_forward.1} parent=131 // pred_check_branch
              %561 = sbr.rel target = $region140
            $region139: #{attention_block_forward.1} parent=131 // pred_region
              %s563 = ssub.s32 256, 1
              loop: start=0, step=1, limit=1
              $region141: #{attention_block_forward.1} parent=139 // loop_pre_header
                _
              $region142: #{attention_block_forward.1} parent=139 // loop_header
                %s565 = sphi 0, %s569
                %p566 = scmp.ge.s32.totalorder %s565, 1
                %s570 = sphi %s548, %s548
                %s571 = sphi %s555, %s555
              $region143: #{attention_block_forward.1} parent=139 // loop_header_branch
                %568 = sbr.rel (%p566) target = $region147
              $region144: #{attention_block_forward.1} parent=139 // loop_body
                %v572 = vld [vmem:[%s570] sm:%s563]
                %573 = vst [vmem:[%s571] sm:%s563] %v572
                %v574 = vld [vmem:[%s570 + $0x8] sm:%s563]
                %575 = vst [vmem:[%s571 + $0x10] sm:%s563] %v574
                %v576 = vld [vmem:[%s570 + $0x10] sm:%s563]
                %577 = vst [vmem:[%s571 + $0x20] sm:%s563] %v576
                %v578 = vld [vmem:[%s570 + $0x18] sm:%s563]
                %579 = vst [vmem:[%s571 + $0x30] sm:%s563] %v578
              $region145: #{attention_block_forward.1} parent=139 // loop_footer
                %s569 = sadd.s32 1, %s565
              $region146: #{attention_block_forward.1} parent=139 // loop_footer_branch
                %564 = sbr.rel target = $region142
              $region147: #{attention_block_forward.1} parent=139 // loop_exit
                _
            $region140: #{attention_block_forward.1} parent=131 // pred_fallthru
              _
          $region132: #{attention_block_forward.1} parent=127 // pred_fallthru
            _
          %600 = vnop
        $region128: #{attention_block_forward.1} parent=115 // pred_fallthru
          _
      $region116: #{attention_block_forward.1} parent=5 // pred_fallthru
        _
      %p601 = scmp.le.s32.totalorder 2, %s15
      // Predicated region
      $region163: #{attention_block_forward.1} parent=5 // pred_check
        %p602 = pneg %p601
      $region164: #{attention_block_forward.1} parent=5 // pred_check_branch
        %604 = sbr.rel (%p602) target = $region166
      $region165: #{attention_block_forward.1} parent=5 // pred_region
        %s605 = ssub.s32 %s15, 2
        // Predicated region
        $region167: #{attention_block_forward.1} parent=165 // pred_check
          %p606 = pneg %p219
        $region168: #{attention_block_forward.1} parent=165 // pred_check_branch
          %608 = sbr.rel (%p606) target = $region170
        $region169: #{attention_block_forward.1} parent=165 // pred_region
          %s609 = sand.u32 %s204, 1
          %s610 = sand.u32 %s204, 1
          %s611 = smul.addr %s610, 32
          %s612 = scalar_lea.vmem [#allocation5], %s611
        $region170: #{attention_block_forward.1} parent=165 // pred_fallthru
          _
      $region166: #{attention_block_forward.1} parent=5 // pred_fallthru
        _
    $region6: #{attention_block_forward.1} parent=1 // loop_footer
      %s19 = sadd.s32 1, %s15
    $region7: #{attention_block_forward.1} parent=1 // loop_footer_branch
      %14 = sbr.rel target = $region3
    $region8: #{attention_block_forward.1} parent=1 // loop_exit
      _

</llo_original>
